<compile_context>
chip_gen: v7x
topology: tpu7x:2x2x1
jax: 0.10.0
libtpu: 0.0.40
codegen_flags: <defaults>
</compile_context>

<pallas_src>
import math
from functools import partial

import jax
import jax.numpy as jnp
from jax import lax
from jax.experimental import pallas as pl
from jax.experimental.pallas import tpu as pltpu


_MASK_VALUE = -0.7 * float(jnp.finfo(jnp.float32).max)


def _round_up(x, m):
    return (x + m - 1) // m * m


def _flash_sdpa_kernel(q_ref, k_ref, v_ref, o_ref, m_sc, l_sc, acc_sc, q_sc,
                       *, inv_sqrt_dim, kv_tile, kv_len, mask_kv, compute_dtype):
    """One (batch, q-tile, kv-tile) grid step of flash attention.

    q_ref: (tq, D)   k_ref/v_ref: (tk, D)   o_ref: (tq, D)
    m_sc/l_sc: (tq, 1) f32, acc_sc: (tq, D) f32, q_sc: (tq, D) compute_dtype.
    """
    ki = pl.program_id(2)

    @pl.when(ki == 0)
    def _init():
        m_sc[...] = jnp.full(m_sc.shape, _MASK_VALUE, dtype=jnp.float32)
        l_sc[...] = jnp.zeros(l_sc.shape, dtype=jnp.float32)
        acc_sc[...] = jnp.zeros(acc_sc.shape, dtype=jnp.float32)
        # Hoist the 1/sqrt(D) scale + MXU-dtype cast out of the KV loop:
        # the Q block stays resident across the whole KV axis.
        q_sc[...] = (q_ref[...] * inv_sqrt_dim).astype(compute_dtype)

    q = q_sc[...]                                  # (tq, D), compute_dtype
    k = k_ref[...].astype(compute_dtype)           # (tk, D)
    v = v_ref[...].astype(compute_dtype)           # (tk, D)

    # s = Q @ K^T on the MXU (bf16 operands, f32 accumulation), contracting
    # the last dim of both operands -> no materialized K^T.
    s = lax.dot_general(
        q, k,
        dimension_numbers=(((1,), (1,)), ((), ())),
        preferred_element_type=jnp.float32)        # (tq, tk) f32

    if mask_kv:
        # Cheap row mask: (1, tk) iota -> additive bias.  It is only nonzero
        # on the (single) partial last KV tile; elsewhere the compare is
        # trivially true, so no per-step select over (tq, tk) is needed.
        col = ki * kv_tile + lax.broadcasted_iota(jnp.int32, (1, s.shape[-1]), 1)
        bias = jnp.where(col < kv_len, 0.0, _MASK_VALUE).astype(jnp.float32)
        s = s + bias

    # Online softmax update (all f32).
    m_prev = m_sc[...]                                        # (tq, 1)
    m_new = jnp.maximum(m_prev, jnp.max(s, axis=-1, keepdims=True))
    alpha = jnp.exp(m_prev - m_new)                           # rescale factor
    p = jnp.exp(s - m_new)                                    # (tq, tk)

    l_sc[...] = alpha * l_sc[...] + jnp.sum(p, axis=-1, keepdims=True)
    acc_sc[...] = alpha * acc_sc[...] + jnp.dot(
        p.astype(compute_dtype), v, preferred_element_type=jnp.float32)
    m_sc[...] = m_new

    @pl.when(ki == pl.num_programs(2) - 1)
    def _finalize():
        # Runs once per (b, q-tile): exact reciprocal is effectively free here.
        inv_l = pl.reciprocal(l_sc[...], approx=False)
        o_ref[...] = (acc_sc[...] * inv_l).astype(o_ref.dtype)


def scaled_dot_product_attention(query, key, value, *, q_tile=512, kv_tile=512):
    """query: (B, Lq, D), key/value: (B, Lk, D) -> context (B, Lq, D)."""
    B, Lq, D = query.shape
    _, Lk, _ = key.shape
    assert key.shape == (B, Lk, D) and value.shape == (B, Lk, D)
    dtype = query.dtype

    # Sublane multiple for this dtype (f32: 8, bf16: 16, int8/fp8: 32).
    sub = {4: 8, 2: 16, 1: 32}[jnp.dtype(dtype).itemsize]

    # Clamp requested tiles to the (rounded) actual lengths so tiny inputs
    # don't over-pad; prefer 128-multiples for big shapes via the defaults.
    tq = min(q_tile, _round_up(Lq, sub))
    tk = min(kv_tile, _round_up(Lk, sub))
    lq_pad = _round_up(Lq, tq)
    lk_pad = _round_up(Lk, tk)

    # No D padding: block last dim == full array dim is legal, and for small
    # head dims padding to 128 would 4x the K/V/Q HBM streaming.
    def _pad_seq(x, l_pad):
        if x.shape[1] == l_pad:
            return x
        return jnp.pad(x, ((0, 0), (0, l_pad - x.shape[1]), (0, 0)))

    qp = _pad_seq(query, lq_pad)
    kp = _pad_seq(key, lk_pad)
    vp = _pad_seq(value, lk_pad)

    # f32 inputs: run the matmuls on the native bf16 MXU path (f32 accumulate).
    compute_dtype = jnp.bfloat16 if jnp.dtype(dtype) == jnp.float32 else dtype

    kernel = partial(
        _flash_sdpa_kernel,
        inv_sqrt_dim=1.0 / math.sqrt(D),   # uses the true D, as in torch
        kv_tile=tk,
        kv_len=Lk,
        mask_kv=(lk_pad != Lk),
        compute_dtype=compute_dtype,
    )

    grid = (B, lq_pad // tq, lk_pad // tk)

    # VMEM budget: double-buffered Q/K/V/out blocks + persistent scratch,
    # with 2x + 2 MiB headroom; capped at 48 MiB (safe on v7x's 64 MiB VMEM),
    # floored at 16 MiB.
    itemsize = jnp.dtype(dtype).itemsize
    c_itemsize = jnp.dtype(compute_dtype).itemsize
    block_bytes = (tq * D + 2 * tk * D + tq * D) * itemsize      # q + k + v + out
    scratch_bytes = (2 * tq + tq * D) * 4 + tq * D * c_itemsize  # m,l,acc + q_scaled
    needed = 2 * block_bytes + scratch_bytes
    vmem_limit = int(min(max(2 * needed + (2 << 20), 16 << 20), 48 << 20))

    out = pl.pallas_call(
        kernel,
        out_shape=jax.ShapeDtypeStruct((B, lq_pad, D), dtype),
        grid_spec=pltpu.PrefetchScalarGridSpec(
            num_scalar_prefetch=0,
            grid=grid,
            in_specs=[
                # Leading batch dim squeezed out of the kernel refs.
                pl.BlockSpec((None, tq, D), lambda b, qi, ki: (b, qi, 0)),
                pl.BlockSpec((None, tk, D), lambda b, qi, ki: (b, ki, 0)),
                pl.BlockSpec((None, tk, D), lambda b, qi, ki: (b, ki, 0)),
            ],
            # Same output block across the KV axis -> stays resident in VMEM,
            # written back to HBM once per (b, q-tile).
            out_specs=pl.BlockSpec((None, tq, D), lambda b, qi, ki: (b, qi, 0)),
            scratch_shapes=[
                pltpu.VMEM((tq, 1), jnp.float32),      # m (running max)
                pltpu.VMEM((tq, 1), jnp.float32),      # l (running denom)
                pltpu.VMEM((tq, D), jnp.float32),      # acc (unnormalized ctx)
                pltpu.VMEM((tq, D), compute_dtype),    # scaled + cast Q block
            ],
        ),
        compiler_params=pltpu.CompilerParams(
            dimension_semantics=("parallel", "parallel", "arbitrary"),
            vmem_limit_bytes=vmem_limit,
        ),
    )(qp, kp, vp)

    if lq_pad != Lq:
        out = out[:, :Lq, :]
    return out


def _reference(query, key, value):
    # Pure-JAX reference matching the PyTorch forward.
    d = query.shape[-1]
    score = jnp.einsum("bqd,bkd->bqk", query, key) / jnp.sqrt(jnp.float32(d))
    attn = jax.nn.softmax(score, axis=-1)
    return jnp.einsum("bqk,bkd->bqd", attn, value)


if __name__ == "__main__":
    root = jax.random.PRNGKey(0)
    k1, k2, k3, k4, k5, k6 = jax.random.split(root, 6)

    # Tolerance note: Q/K/V/P are fed to the MXU in bf16 (f32 accumulation),
    # so compare with a modest tolerance; structural bugs give O(1) errors.
    ATOL = RTOL = 2e-2

    # Case 1: small shapes consistent with the module (batch=2, seq=8, d=32).
    B, L, D = 2, 8, 32
    q = jax.random.normal(k1, (B, L, D), dtype=jnp.float32)
    k = jax.random.normal(k2, (B, L, D), dtype=jnp.float32)
    v = jax.random.normal(k3, (B, L, D), dtype=jnp.float32)

    out = jax.block_until_ready(scaled_dot_product_attention(q, k, v))
    ref = _reference(q, k, v)
    assert out.shape == (B, L, D)
    assert jnp.allclose(out, ref, atol=ATOL, rtol=RTOL), "case 1 mismatch"

    # Case 2: exercises the flash tiling + partial-KV-tile mask path
    # (Lq = Lk = 300 with 128-tiles -> 3x3 Q/KV tile grid, padded last tile).
    B2, L2, D2 = 2, 300, 32
    q2 = jax.random.normal(k4, (B2, L2, D2), dtype=jnp.float32)
    k2_ = jax.random.normal(k5, (B2, L2, D2), dtype=jnp.float32)
    v2 = jax.random.normal(k6, (B2, L2, D2), dtype=jnp.float32)

    out2 = jax.block_until_ready(
        scaled_dot_product_attention(q2, k2_, v2, q_tile=128, kv_tile=128))
    ref2 = _reference(q2, k2_, v2)
    assert out2.shape == (B2, L2, D2)
    assert jnp.allclose(out2, ref2, atol=ATOL, rtol=RTOL), "case 2 mismatch"

    print("KERNEL_OK")
</pallas_src>

<mosaic_0001>
module attributes {stable_mosaic.version = 11 : i64} {
  func.func @_flash_sdpa_kernel(%arg0: i32, %arg1: i32, %arg2: i32, %arg3: memref<1x8x32xf32, #tpu.memory_space<vmem>>, %arg4: memref<1x8x32xf32, #tpu.memory_space<vmem>>, %arg5: memref<1x8x32xf32, #tpu.memory_space<vmem>>, %arg6: memref<1x8x32xf32, #tpu.memory_space<vmem>>, %arg7: memref<8x1xf32, #tpu.memory_space<vmem>>, %arg8: memref<8x1xf32, #tpu.memory_space<vmem>>, %arg9: memref<8x32xf32, #tpu.memory_space<vmem>>, %arg10: memref<8x32xbf16, #tpu.memory_space<vmem>>) attributes {dimension_semantics = [#tpu.dimension_semantics<parallel>, #tpu.dimension_semantics<parallel>, #tpu.dimension_semantics<arbitrary>], iteration_bounds = array<i64: 2, 1, 1>, scalar_prefetch = 0 : i64, scratch_operands = 4 : i64, tpu.core_type = #tpu.core_type<tc>, window_params = [{transform_indices = @transform_0, window_bounds = array<i64: 1, 8, 32>}, {transform_indices = @transform_1, window_bounds = array<i64: 1, 8, 32>}, {transform_indices = @transform_2, window_bounds = array<i64: 1, 8, 32>}, {transform_indices = @transform_3, window_bounds = array<i64: 1, 8, 32>}]} {
    %c0_i32 = arith.constant 0 : i32
    %0 = arith.cmpi eq, %arg2, %c0_i32 : i32
    %1 = arith.extui %0 : i1 to i32
    %c0_i32_0 = arith.constant 0 : i32
    %2 = arith.cmpi ne, %1, %c0_i32_0 : i32
    scf.if %2 {
      %cst_25 = arith.constant -2.38197633E+38 : f32
      %37 = vector.broadcast %cst_25 : f32 to vector<8x1xf32>
      %c0_26 = arith.constant 0 : index
      %c0_27 = arith.constant 0 : index
      %38 = vector.load %arg7[%c0_26, %c0_27] : memref<8x1xf32, #tpu.memory_space<vmem>>, vector<8x1xf32>
      tpu.vector_store %arg7[%c0_26, %c0_27], %37 {strides = array<i32>} : memref<8x1xf32, #tpu.memory_space<vmem>>, vector<8x1xf32>,
      %cst_28 = arith.constant 0.000000e+00 : f32
      %39 = vector.broadcast %cst_28 : f32 to vector<8x1xf32>
      %c0_29 = arith.constant 0 : index
      %c0_30 = arith.constant 0 : index
      %40 = vector.load %arg8[%c0_29, %c0_30] : memref<8x1xf32, #tpu.memory_space<vmem>>, vector<8x1xf32>
      tpu.vector_store %arg8[%c0_29, %c0_30], %39 {strides = array<i32>} : memref<8x1xf32, #tpu.memory_space<vmem>>, vector<8x1xf32>,
      %cst_31 = arith.constant 0.000000e+00 : f32
      %41 = vector.broadcast %cst_31 : f32 to vector<8x32xf32>
      %c0_32 = arith.constant 0 : index
      %c0_33 = arith.constant 0 : index
      %42 = vector.load %arg9[%c0_32, %c0_33] : memref<8x32xf32, #tpu.memory_space<vmem>>, vector<8x32xf32>
      tpu.vector_store %arg9[%c0_32, %c0_33], %41 {strides = array<i32>} : memref<8x32xf32, #tpu.memory_space<vmem>>, vector<8x32xf32>,
      %c0_34 = arith.constant 0 : index
      %c0_35 = arith.constant 0 : index
      %c0_36 = arith.constant 0 : index
      %43 = vector.load %arg3[%c0_34, %c0_35, %c0_36] : memref<1x8x32xf32, #tpu.memory_space<vmem>>, vector<1x8x32xf32>
      %44 = vector.shape_cast %43 : vector<1x8x32xf32> to vector<8x32xf32>
      %cst_37 = arith.constant 0.176776692 : f32
      %45 = vector.broadcast %cst_37 : f32 to vector<8x32xf32>
      %46 = arith.mulf %44, %45 : vector<8x32xf32>
      %47 = arith.truncf %46 : vector<8x32xf32> to vector<8x32xbf16>
      %c0_38 = arith.constant 0 : index
      %c0_39 = arith.constant 0 : index
      %48 = vector.load %arg10[%c0_38, %c0_39] : memref<8x32xbf16, #tpu.memory_space<vmem>>, vector<8x32xbf16>
      tpu.vector_store %arg10[%c0_38, %c0_39], %47 {strides = array<i32>} : memref<8x32xbf16, #tpu.memory_space<vmem>>, vector<8x32xbf16>,
    } else {
    }
    %c0 = arith.constant 0 : index
    %c0_1 = arith.constant 0 : index
    %3 = vector.load %arg10[%c0, %c0_1] : memref<8x32xbf16, #tpu.memory_space<vmem>>, vector<8x32xbf16>
    %c0_2 = arith.constant 0 : index
    %c0_3 = arith.constant 0 : index
    %c0_4 = arith.constant 0 : index
    %4 = vector.load %arg4[%c0_2, %c0_3, %c0_4] : memref<1x8x32xf32, #tpu.memory_space<vmem>>, vector<1x8x32xf32>
    %5 = vector.shape_cast %4 : vector<1x8x32xf32> to vector<8x32xf32>
    %6 = arith.truncf %5 : vector<8x32xf32> to vector<8x32xbf16>
    %c0_5 = arith.constant 0 : index
    %c0_6 = arith.constant 0 : index
    %c0_7 = arith.constant 0 : index
    %7 = vector.load %arg5[%c0_5, %c0_6, %c0_7] : memref<1x8x32xf32, #tpu.memory_space<vmem>>, vector<1x8x32xf32>
    %8 = vector.shape_cast %7 : vector<1x8x32xf32> to vector<8x32xf32>
    %9 = arith.truncf %8 : vector<8x32xf32> to vector<8x32xbf16>
    %cst = arith.constant dense<0.000000e+00> : vector<8x8xf32>
    %10 = tpu.matmul %3, %6, %cst {dimension_numbers = #tpu.dot_dimension_numbers<[1], [1], [0], [0], [0, 0, 1, 0], [], []>} : vector<8x32xbf16>, vector<8x32xbf16>, vector<8x8xf32> -> vector<8x8xf32>
    %c0_8 = arith.constant 0 : index
    %c0_9 = arith.constant 0 : index
    %11 = vector.load %arg7[%c0_8, %c0_9] : memref<8x1xf32, #tpu.memory_space<vmem>>, vector<8x1xf32>
    %cst_10 = arith.constant dense<0xFF800000> : vector<8xf32>
    %12 = vector.multi_reduction <maximumf>, %10, %cst_10 [1] : vector<8x8xf32> to vector<8xf32>
    %13 = vector.shape_cast %12 : vector<8xf32> to vector<8x1xf32>
    %14 = arith.maximumf %11, %13 : vector<8x1xf32>
    %15 = arith.subf %11, %14 : vector<8x1xf32>
    %16 = math.exp %15 : vector<8x1xf32>
    %17 = vector.broadcast %14 : vector<8x1xf32> to vector<8x8xf32>
    %18 = arith.subf %10, %17 : vector<8x8xf32>
    %19 = math.exp %18 : vector<8x8xf32>
    %c0_11 = arith.constant 0 : index
    %c0_12 = arith.constant 0 : index
    %20 = vector.load %arg8[%c0_11, %c0_12] : memref<8x1xf32, #tpu.memory_space<vmem>>, vector<8x1xf32>
    %21 = arith.mulf %16, %20 : vector<8x1xf32>
    %cst_13 = arith.constant dense<0.000000e+00> : vector<8xf32>
    %22 = vector.multi_reduction <add>, %19, %cst_13 [1] : vector<8x8xf32> to vector<8xf32>
    %23 = vector.shape_cast %22 : vector<8xf32> to vector<8x1xf32>
    %24 = arith.addf %21, %23 : vector<8x1xf32>
    %c0_14 = arith.constant 0 : index
    %c0_15 = arith.constant 0 : index
    %25 = vector.load %arg8[%c0_14, %c0_15] : memref<8x1xf32, #tpu.memory_space<vmem>>, vector<8x1xf32>
    tpu.vector_store %arg8[%c0_14, %c0_15], %24 {strides = array<i32>} : memref<8x1xf32, #tpu.memory_space<vmem>>, vector<8x1xf32>,
    %c0_16 = arith.constant 0 : index
    %c0_17 = arith.constant 0 : index
    %26 = vector.load %arg9[%c0_16, %c0_17] : memref<8x32xf32, #tpu.memory_space<vmem>>, vector<8x32xf32>
    %27 = vector.broadcast %16 : vector<8x1xf32> to vector<8x32xf32>
    %28 = arith.mulf %27, %26 : vector<8x32xf32>
    %29 = arith.truncf %19 : vector<8x8xf32> to vector<8x8xbf16>
    %cst_18 = arith.constant dense<0.000000e+00> : vector<8x32xf32>
    %30 = tpu.matmul %29, %9, %cst_18 {dimension_numbers = #tpu.dot_dimension_numbers<[1], [0], [0], [1], [0, 0, 1, 1], [], []>} : vector<8x8xbf16>, vector<8x32xbf16>, vector<8x32xf32> -> vector<8x32xf32>
    %31 = arith.addf %28, %30 : vector<8x32xf32>
    %c0_19 = arith.constant 0 : index
    %c0_20 = arith.constant 0 : index
    %32 = vector.load %arg9[%c0_19, %c0_20] : memref<8x32xf32, #tpu.memory_space<vmem>>, vector<8x32xf32>
    tpu.vector_store %arg9[%c0_19, %c0_20], %31 {strides = array<i32>} : memref<8x32xf32, #tpu.memory_space<vmem>>, vector<8x32xf32>,
    %c0_21 = arith.constant 0 : index
    %c0_22 = arith.constant 0 : index
    %33 = vector.load %arg7[%c0_21, %c0_22] : memref<8x1xf32, #tpu.memory_space<vmem>>, vector<8x1xf32>
    tpu.vector_store %arg7[%c0_21, %c0_22], %14 {strides = array<i32>} : memref<8x1xf32, #tpu.memory_space<vmem>>, vector<8x1xf32>,
    %c0_i32_23 = arith.constant 0 : i32
    %34 = arith.cmpi eq, %arg2, %c0_i32_23 : i32
    %35 = arith.extui %34 : i1 to i32
    %c0_i32_24 = arith.constant 0 : i32
    %36 = arith.cmpi ne, %35, %c0_i32_24 : i32
    scf.if %36 {
      %c0_25 = arith.constant 0 : index
      %c0_26 = arith.constant 0 : index
      %37 = vector.load %arg8[%c0_25, %c0_26] : memref<8x1xf32, #tpu.memory_space<vmem>>, vector<8x1xf32>
      %38 = tpu.reciprocal %37 : vector<8x1xf32> -> vector<8x1xf32>
      %c0_27 = arith.constant 0 : index
      %c0_28 = arith.constant 0 : index
      %39 = vector.load %arg9[%c0_27, %c0_28] : memref<8x32xf32, #tpu.memory_space<vmem>>, vector<8x32xf32>
      %40 = vector.broadcast %38 : vector<8x1xf32> to vector<8x32xf32>
      %41 = arith.mulf %39, %40 : vector<8x32xf32>
      %c0_29 = arith.constant 0 : index
      %c0_30 = arith.constant 0 : index
      %c0_31 = arith.constant 0 : index
      %42 = vector.load %arg6[%c0_29, %c0_30, %c0_31] : memref<1x8x32xf32, #tpu.memory_space<vmem>>, vector<1x8x32xf32>
      %43 = vector.shape_cast %42 : vector<1x8x32xf32> to vector<8x32xf32>
      %44 = vector.shape_cast %41 : vector<8x32xf32> to vector<1x8x32xf32>
      tpu.vector_store %arg6[%c0_29, %c0_30, %c0_31], %44 {strides = array<i32>} : memref<1x8x32xf32, #tpu.memory_space<vmem>>, vector<1x8x32xf32>,
    } else {
    }
    return
  }
  func.func @transform_0(%arg0: i32, %arg1: i32, %arg2: i32) -> (i32, i32, i32) {
    %c0_i32 = arith.constant 0 : i32
    %c0_i32_0 = arith.constant 0 : i32
    return %arg0, %arg1, %c0_i32 : i32, i32, i32
  }
  func.func @transform_1(%arg0: i32, %arg1: i32, %arg2: i32) -> (i32, i32, i32) {
    %c0_i32 = arith.constant 0 : i32
    %c0_i32_0 = arith.constant 0 : i32
    return %arg0, %arg2, %c0_i32 : i32, i32, i32
  }
  func.func @transform_2(%arg0: i32, %arg1: i32, %arg2: i32) -> (i32, i32, i32) {
    %c0_i32 = arith.constant 0 : i32
    %c0_i32_0 = arith.constant 0 : i32
    return %arg0, %arg2, %c0_i32 : i32, i32, i32
  }
  func.func @transform_3(%arg0: i32, %arg1: i32, %arg2: i32) -> (i32, i32, i32) {
    %c0_i32 = arith.constant 0 : i32
    %c0_i32_0 = arith.constant 0 : i32
    return %arg0, %arg1, %c0_i32 : i32, i32, i32
  }
}

</mosaic_0001>

<llo_original>
// kernel: tpu_custom_call.1
$region0: #{tpu_custom_call.1}
  #allocation0 [shape = 'u32[]', space=smem, size = 0x4, offset = 0x4, fixed_abs, tag = 'smem constant byte address 0x4 - core index']
  #allocation1 [shape = 'u32[144,128]{1,0:T(1,128)}', space=vmem, size = 0x12000, scoped, tag = 'internal scratch']
  #allocation2 [shape = 'f32[8,1]{1,0:T(8,128)}', space=vmem, size = 0x1000, scoped, tag = 'scratch operand']
  #allocation3 [shape = 'f32[8,1]{1,0:T(8,128)}', space=vmem, size = 0x1000, scoped, tag = 'scratch operand']
  #allocation4 [shape = 'f32[8,32]{1,0:T(8,128)}', space=vmem, size = 0x1000, scoped, tag = 'scratch operand']
  #allocation5 [shape = 'bf16[8,32]{1,0:T(8,128)(2,1)}', space=vmem, size = 0x800, scoped, tag = 'scratch operand']
  %s0 = inlined_call_operand.hbm [shape: f32[2,8,32], index: 0, kind: input, shape index: {}]
  %s1 = inlined_call_operand.hbm [shape: f32[2,8,32], index: 1, kind: input, shape index: {}]
  %s2 = inlined_call_operand.hbm [shape: f32[2,8,32], index: 2, kind: input, shape index: {}]
  %s3 = inlined_call_operand.hbm [shape: f32[2,8,32], index: 3, kind: output, shape index: {}]
  %s4 = sld [smem:[#allocation0]]
  $region65: #{tpu_custom_call.1} parent=0
    _
  %s6 = ssub.s32 1, %s4
  %s7 = scalar_select 0, %s6, %s4
  $region1: #{tpu_custom_call.1} parent=0
    #allocation6 [shape = 'u8[8192]{0}', space=vmem, size = 0x2000, scoped, tag = 'input window, operand 0']
    #allocation7 [shape = 's32[2]{0}', space=sflag, size = 0x8, scoped, tag = 'scoped memory for tpu_custom_call.1']
    #allocation8 [shape = 's32[2]{0}', space=sflag, size = 0x8, scoped, tag = 'scoped memory for tpu_custom_call.1']
    #allocation9 [shape = 'u8[8192]{0}', space=vmem, size = 0x2000, scoped, tag = 'input window, operand 1']
    #allocation10 [shape = 's32[2]{0}', space=sflag, size = 0x8, scoped, tag = 'scoped memory for tpu_custom_call.1']
    #allocation11 [shape = 'u8[8192]{0}', space=vmem, size = 0x2000, scoped, tag = 'input window, operand 2']
    #allocation12 [shape = 'u8[8192]{0}', space=vmem, size = 0x2000, scoped, tag = 'output window, operand 0']
    %8 = vsyncpa [#allocation7], 0
    %s9 = scalar_lea.sflag [#allocation7], 1
    %10 = vsyncpa %s9, 0
    %11 = vsyncpa [#allocation10], 0
    %s12 = scalar_lea.sflag [#allocation10], 1
    %13 = vsyncpa %s12, 0
    %14 = vsyncpa [#allocation8], 0
    %s15 = scalar_lea.sflag [#allocation8], 1
    %16 = vsyncpa %s15, 0
    loop: start=0, step=1, limit=4
    $region2: #{tpu_custom_call.1} parent=1 // loop_pre_header
      _
    $region3: #{tpu_custom_call.1} parent=1 // loop_header
      %s18 = sphi 0, %s22
      %p19 = scmp.ge.s32.totalorder %s18, 4
      %s25 = sphi 0, %s44
      %s26 = sphi 0, %s40
      %s27 = sphi 0, %s36
      %s28 = sphi 0, %s25
      %s29 = sphi 0, %s26
      %s30 = sphi 0, %s27
      %s31 = sphi 0, %s28
      %s32 = sphi 0, %s29
      %s33 = sphi 0, %s30
      %s49 = sphi 0, %s51
      %s52 = sphi 0, %s49
      %s53 = sphi 0, %s52
      %s69 = sphi 0, %s53
      %s77 = sphi 0, %s79
      %s80 = sphi 0, %s77
      %s81 = sphi 0, %s80
      %s97 = sphi 0, %s81
      %s105 = sphi 0, %s107
      %s108 = sphi 0, %s105
      %s109 = sphi 0, %s108
      %s125 = sphi 0, %s109
      %s133 = sphi 0, %s135
      %s136 = sphi 0, %s133
      %s137 = sphi 0, %s136
      %s153 = sphi 0, %s137
    $region4: #{tpu_custom_call.1} parent=1 // loop_header_branch
      %21 = sbr.rel (%p19) target = $region8
    $region5: #{tpu_custom_call.1} parent=1 // loop_body
      %s23 = ssub.s32 %s18, 1
      %s24 = ssub.s32 %s18, 2
      %s34 = sadd.s32 1, %s27
      %p35 = scmp.ge.s32.totalorder %s34, 1
      %s36 = scalar_select %p35, 0, %s34
      %s37 = sadd.s32 1, %s26
      %s38 = scalar_select %p35, %s37, %s26
      %p39 = scmp.ge.s32.totalorder %s38, 1
      %s40 = scalar_select %p39, 0, %s38
      %s41 = sadd.s32 1, %s25
      %s42 = scalar_select %p39, %s41, %s25
      %p43 = scmp.ge.s32.totalorder %s42, 2
      %s44 = scalar_select %p43, 0, %s42
      %s45 = ssub.s32 %s25, %s44
      %s46 = ssub.s32 %s26, %s40
      %s47 = sor.u32 %s45, %s46
      %p48 = scmp.eq.s32.totalorder %s47, 0
      %s50 = sadd.s32 %s49, 1
      %s51 = scalar_select %p48, %s49, %s50
      %p54 = pneg %p48
      %p55 = scmp.eq.s32.totalorder %s18, 1
      %p56 = por %p54, %p55
      %p57 = scmp.ne.s32.totalorder %s49, %s52
      %p58 = scmp.eq.s32.totalorder %s18, 0
      %p59 = por %p57, %p58
      %p60 = scmp.ne.s32.totalorder %s49, %s52
      %p61 = scmp.eq.s32.totalorder %s23, 1
      %p62 = por %p60, %p61
      %p63 = scmp.ne.s32.totalorder %s52, %s53
      %p64 = scmp.eq.s32.totalorder %s23, 0
      %p65 = por %p63, %p64
      %p66 = scmp.ne.s32.totalorder %s52, %s53
      %p67 = scmp.eq.s32.totalorder %s24, 1
      %p68 = por %p66, %p67
      %p70 = scmp.ne.s32.totalorder %s53, %s69
      %p71 = scmp.eq.s32.totalorder %s24, 0
      %p72 = por %p70, %p71
      %s73 = ssub.s32 %s25, %s44
      %s74 = ssub.s32 %s27, %s36
      %s75 = sor.u32 %s73, %s74
      %p76 = scmp.eq.s32.totalorder %s75, 0
      %s78 = sadd.s32 %s77, 1
      %s79 = scalar_select %p76, %s77, %s78
      %p82 = pneg %p76
      %p83 = scmp.eq.s32.totalorder %s18, 1
      %p84 = por %p82, %p83
      %p85 = scmp.ne.s32.totalorder %s77, %s80
      %p86 = scmp.eq.s32.totalorder %s18, 0
      %p87 = por %p85, %p86
      %p88 = scmp.ne.s32.totalorder %s77, %s80
      %p89 = scmp.eq.s32.totalorder %s23, 1
      %p90 = por %p88, %p89
      %p91 = scmp.ne.s32.totalorder %s80, %s81
      %p92 = scmp.eq.s32.totalorder %s23, 0
      %p93 = por %p91, %p92
      %p94 = scmp.ne.s32.totalorder %s80, %s81
      %p95 = scmp.eq.s32.totalorder %s24, 1
      %p96 = por %p94, %p95
      %p98 = scmp.ne.s32.totalorder %s81, %s97
      %p99 = scmp.eq.s32.totalorder %s24, 0
      %p100 = por %p98, %p99
      %s101 = ssub.s32 %s25, %s44
      %s102 = ssub.s32 %s27, %s36
      %s103 = sor.u32 %s101, %s102
      %p104 = scmp.eq.s32.totalorder %s103, 0
      %s106 = sadd.s32 %s105, 1
      %s107 = scalar_select %p104, %s105, %s106
      %p110 = pneg %p104
      %p111 = scmp.eq.s32.totalorder %s18, 1
      %p112 = por %p110, %p111
      %p113 = scmp.ne.s32.totalorder %s105, %s108
      %p114 = scmp.eq.s32.totalorder %s18, 0
      %p115 = por %p113, %p114
      %p116 = scmp.ne.s32.totalorder %s105, %s108
      %p117 = scmp.eq.s32.totalorder %s23, 1
      %p118 = por %p116, %p117
      %p119 = scmp.ne.s32.totalorder %s108, %s109
      %p120 = scmp.eq.s32.totalorder %s23, 0
      %p121 = por %p119, %p120
      %p122 = scmp.ne.s32.totalorder %s108, %s109
      %p123 = scmp.eq.s32.totalorder %s24, 1
      %p124 = por %p122, %p123
      %p126 = scmp.ne.s32.totalorder %s109, %s125
      %p127 = scmp.eq.s32.totalorder %s24, 0
      %p128 = por %p126, %p127
      %s129 = ssub.s32 %s25, %s44
      %s130 = ssub.s32 %s26, %s40
      %s131 = sor.u32 %s129, %s130
      %p132 = scmp.eq.s32.totalorder %s131, 0
      %s134 = sadd.s32 %s133, 1
      %s135 = scalar_select %p132, %s133, %s134
      %p138 = pneg %p132
      %p139 = scmp.eq.s32.totalorder %s18, 1
      %p140 = por %p138, %p139
      %p141 = scmp.ne.s32.totalorder %s133, %s136
      %p142 = scmp.eq.s32.totalorder %s18, 0
      %p143 = por %p141, %p142
      %p144 = scmp.ne.s32.totalorder %s133, %s136
      %p145 = scmp.eq.s32.totalorder %s23, 1
      %p146 = por %p144, %p145
      %p147 = scmp.ne.s32.totalorder %s136, %s137
      %p148 = scmp.eq.s32.totalorder %s23, 0
      %p149 = por %p147, %p148
      %p150 = scmp.ne.s32.totalorder %s136, %s137
      %p151 = scmp.eq.s32.totalorder %s24, 1
      %p152 = por %p150, %p151
      %p154 = scmp.ne.s32.totalorder %s137, %s153
      %p155 = scmp.eq.s32.totalorder %s24, 0
      %p156 = por %p154, %p155
      %p157 = scmp.le.s32.totalorder 1, %s18
      %p158 = scmp.lt.s32.totalorder %s18, 3
      %p159 = pnand %p157, %p158
      %p160 = pneg %p159
      // Predicated region
      $region9: #{tpu_custom_call.1} parent=5 // pred_check
        _
      $region10: #{tpu_custom_call.1} parent=5 // pred_check_branch
        %162 = sbr.rel (%p159) target = $region12
      $region11: #{tpu_custom_call.1} parent=5 // pred_region
        %s163 = ssub.s32 %s18, 1
      $region12: #{tpu_custom_call.1} parent=5 // pred_fallthru
        _
      %p164 = scmp.lt.s32.totalorder %s18, 2
      // Predicated region
      $region13: #{tpu_custom_call.1} parent=5 // pred_check
        %p165 = pneg %p164
      $region14: #{tpu_custom_call.1} parent=5 // pred_check_branch
        %167 = sbr.rel (%p165) target = $region16
      $region15: #{tpu_custom_call.1} parent=5 // pred_region
        // Predicated region
        $region17: #{tpu_custom_call.1} parent=15 // pred_check
          %p168 = pneg %p59
        $region18: #{tpu_custom_call.1} parent=15 // pred_check_branch
          %170 = sbr.rel (%p168) target = $region20
        $region19: #{tpu_custom_call.1} parent=15 // pred_region
          %s171 = sand.u32 %s49, 1
          %s172 = scalar_lea.sflag [#allocation7], %s171
          %s173 = sand.u32 %s49, 1
          %s174 = smul.addr %s173, 8
          %s175 = scalar_lea.vmem [#allocation6], %s174
          %s177 = ssub.s32 128, 128
          %178 = vsyncadd %s172, %s177
          %s179 = sadd.s32 %s26, %s25
          %s180 = smul.addr %s179, 128
          %s181 = scalar_lea.hbm %s0, %s180
          %s183 = sshll.u32 %s175, 4
          %s184 = int_to_ptr.vmem [resolvable:$true] %s183
          %186 = dma.hbm_to_vmem [thread:$0]  %s181, 128, %s184, %s172
        $region20: #{tpu_custom_call.1} parent=15 // pred_fallthru
          _
        // Predicated region
        $region21: #{tpu_custom_call.1} parent=15 // pred_check
          %p187 = pneg %p87
        $region22: #{tpu_custom_call.1} parent=15 // pred_check_branch
          %189 = sbr.rel (%p187) target = $region24
        $region23: #{tpu_custom_call.1} parent=15 // pred_region
          %s190 = sand.u32 %s18, 1
          %s191 = scalar_lea.sflag [#allocation10], %s190
          %s192 = sand.u32 %s77, 1
          %s193 = smul.addr %s192, 8
          %s194 = scalar_lea.vmem [#allocation9], %s193
          %s196 = ssub.s32 128, 128
          %197 = vsyncadd %s191, %s196
          %s198 = sadd.s32 %s27, %s25
          %s199 = smul.addr %s198, 128
          %s200 = scalar_lea.hbm %s1, %s199
          %s202 = sshll.u32 %s194, 4
          %s203 = int_to_ptr.vmem [resolvable:$true] %s202
          %205 = dma.hbm_to_vmem [thread:$0]  %s200, 128, %s203, %s191
        $region24: #{tpu_custom_call.1} parent=15 // pred_fallthru
          _
        // Predicated region
        $region25: #{tpu_custom_call.1} parent=15 // pred_check
          %p206 = pneg %p115
        $region26: #{tpu_custom_call.1} parent=15 // pred_check_branch
          %208 = sbr.rel (%p206) target = $region28
        $region27: #{tpu_custom_call.1} parent=15 // pred_region
          %s209 = sand.u32 %s18, 1
          %s210 = scalar_lea.sflag [#allocation10], %s209
          %s211 = sand.u32 %s105, 1
          %s212 = smul.addr %s211, 8
          %s213 = scalar_lea.vmem [#allocation11], %s212
          %s215 = ssub.s32 128, 128
          %216 = vsyncadd %s210, %s215
          %s217 = sadd.s32 %s27, %s25
          %s218 = smul.addr %s217, 128
          %s219 = scalar_lea.hbm %s2, %s218
          %s221 = sshll.u32 %s213, 4
          %s222 = int_to_ptr.vmem [resolvable:$true] %s221
          %224 = dma.hbm_to_vmem [thread:$0]  %s219, 128, %s222, %s210
        $region28: #{tpu_custom_call.1} parent=15 // pred_fallthru
          _
      $region16: #{tpu_custom_call.1} parent=5 // pred_fallthru
        _
      %p225 = scmp.le.s32.totalorder 1, %s18
      %p226 = scmp.lt.s32.totalorder %s18, 3
      %p227 = pnand %p225, %p226
      %p228 = pneg %p227
      // Predicated region
      $region29: #{tpu_custom_call.1} parent=5 // pred_check
        _
      $region30: #{tpu_custom_call.1} parent=5 // pred_check_branch
        %230 = sbr.rel (%p227) target = $region32
      $region31: #{tpu_custom_call.1} parent=5 // pred_region
        %s231 = ssub.s32 %s18, 1
        %s232 = sand.u32 %s52, 1
        %s233 = scalar_lea.sflag [#allocation7], %s232
        %s234 = sand.u32 %s52, 1
        %s235 = smul.addr %s234, 8
        %s236 = scalar_lea.vmem [#allocation6], %s235
        // Predicated region
        $region33: #{tpu_custom_call.1} parent=31 // pred_check
          %p237 = pneg %p65
        $region34: #{tpu_custom_call.1} parent=31 // pred_check_branch
          %239 = sbr.rel (%p237) target = $region36
        $region35: #{tpu_custom_call.1} parent=31 // pred_region
          %240 = dma.done %s233, 128
        $region36: #{tpu_custom_call.1} parent=31 // pred_fallthru
          _
        %s241 = sand.u32 %s23, 1
        %s242 = scalar_lea.sflag [#allocation10], %s241
        %s243 = sand.u32 %s80, 1
        %s244 = smul.addr %s243, 8
        %s245 = scalar_lea.vmem [#allocation9], %s244
        // Predicated region
        $region37: #{tpu_custom_call.1} parent=31 // pred_check
          %p246 = pneg %p93
        $region38: #{tpu_custom_call.1} parent=31 // pred_check_branch
          %248 = sbr.rel (%p246) target = $region40
        $region39: #{tpu_custom_call.1} parent=31 // pred_region
          %249 = dma.done %s242, 128
        $region40: #{tpu_custom_call.1} parent=31 // pred_fallthru
          _
        %s250 = sand.u32 %s23, 1
        %s251 = scalar_lea.sflag [#allocation10], %s250
        %s252 = sand.u32 %s108, 1
        %s253 = smul.addr %s252, 8
        %s254 = scalar_lea.vmem [#allocation11], %s253
        // Predicated region
        $region41: #{tpu_custom_call.1} parent=31 // pred_check
          %p255 = pneg %p121
        $region42: #{tpu_custom_call.1} parent=31 // pred_check_branch
          %257 = sbr.rel (%p255) target = $region44
        $region43: #{tpu_custom_call.1} parent=31 // pred_region
          %258 = dma.done %s251, 128
        $region44: #{tpu_custom_call.1} parent=31 // pred_fallthru
          _
        %s259 = sand.u32 %s52, 1
        %s260 = scalar_lea.sflag [#allocation7], %s259
        %s261 = sand.u32 %s52, 1
        %s262 = smul.addr %s261, 8
        %s263 = scalar_lea.vmem [#allocation6], %s262
        %p264 = pneg %p65
        %p265 = pneg %p62
        %s266 = sand.u32 %s23, 1
        %s267 = scalar_lea.sflag [#allocation10], %s266
        %s268 = sand.u32 %s80, 1
        %s269 = smul.addr %s268, 8
        %s270 = scalar_lea.vmem [#allocation9], %s269
        %p271 = pneg %p93
        %p272 = pneg %p90
        %s273 = sand.u32 %s23, 1
        %s274 = scalar_lea.sflag [#allocation10], %s273
        %s275 = sand.u32 %s108, 1
        %s276 = smul.addr %s275, 8
        %s277 = scalar_lea.vmem [#allocation11], %s276
        %p278 = pneg %p121
        %p279 = pneg %p118
        %p280 = pneg %p149
        %p281 = pneg %p146
        %s282 = sand.u32 %s136, 1
        %s283 = scalar_lea.sflag [#allocation8], %s282
        %s284 = sand.u32 %s136, 1
        %s285 = smul.addr %s284, 8
        %s286 = scalar_lea.vmem [#allocation12], %s285
        %p288 = scmp.eq.s32.totalorder %s30, 0
        // Predicated region
        $region45: #{tpu_custom_call.1} parent=31 // pred_check
          %p289 = pneg %p288
        $region46: #{tpu_custom_call.1} parent=31 // pred_check_branch
          %291 = sbr.rel (%p289) target = $region48
        $region47: #{tpu_custom_call.1} parent=31 // pred_region
          %vm292 = vcmask 7168
          %293 = vst.msk [vmem:[#allocation2] sm:$0xff] %vm292, -2.3819763e+38
          %294 = vst.msk [vmem:[#allocation3] sm:$0xff] %vm292, 0.0
          %vm295 = vcmask 261120
          %296 = vst.msk [vmem:[#allocation4] sm:$0xff] %vm295, 0.0
          %v297 = vld [vmem:[%s236] sm:$0xff]
          %v298 = vmul.f32 %v297, 0.17677669
          %v299 = vpack.c.bf16 %v298, %v298
          %vm300 = vcmask 257024
          %301 = vst.msk [vmem:[#allocation5] sm:$0xf] %vm300, %v299
        $region48: #{tpu_custom_call.1} parent=31 // pred_fallthru
          _
        %v302 = vld [vmem:[#allocation5] sm:$0xf]
        %v303 = vld [vmem:[%s245] sm:$0xff]
        %v304 = vpack.c.bf16 %v303, %v303
        %v305 = vld [vmem:[%s254] sm:$0xff]
        %v306 = vpack.c.bf16 %v305, %v305
        %vm307 = vcmask 261120
        %v309 = vsel %vm307, %v302, 0
        %v312 = vsel %vm307, %v304, 0
        %314 = vmatprep.subr.bf16.mxu0 0
        %315 = vmatpush1.bf16.xpose.msra.mxu0 %v312
        %316 = vmatprep.subr.bf16.mxu0 0
        %317 = vmatpush1.bf16.xpose.msra.mxu0 0
        %318 = vmatprep.subr.bf16.mxu0 0
        %319 = vmatpush1.bf16.xpose.msra.mxu0 0
        %320 = vmatprep.subr.bf16.mxu0 0
        %321 = vmatpush1.bf16.xpose.msra.mxu0 0
        %322 = vmatprep.subr.bf16.mxu0 0
        %323 = vmatpush1.bf16.xpose.msra.mxu0 0
        %324 = vmatprep.subr.bf16.mxu0 0
        %325 = vmatpush1.bf16.xpose.msra.mxu0 0
        %326 = vmatprep.subr.bf16.mxu0 0
        %327 = vmatpush1.bf16.xpose.msra.mxu0 0
        %328 = vmatprep.subr.bf16.mxu0 0
        %329 = vmatpush1.bf16.xpose.msra.mxu0 0
        %330 = vmatprep.subr.bf16.mxu0 0
        %331 = vmatpush1.bf16.xpose.msra.mxu0 0
        %332 = vmatprep.subr.bf16.mxu0 0
        %333 = vmatpush1.bf16.xpose.msra.mxu0 0
        %334 = vmatprep.subr.bf16.mxu0 0
        %335 = vmatpush1.bf16.xpose.msra.mxu0 0
        %336 = vmatprep.subr.bf16.mxu0 0
        %337 = vmatpush1.bf16.xpose.msra.mxu0 0
        %338 = vmatprep.subr.bf16.mxu0 0
        %339 = vmatpush1.bf16.xpose.msra.mxu0 0
        %340 = vmatprep.subr.bf16.mxu0 0
        %341 = vmatpush1.bf16.xpose.msra.mxu0 0
        %342 = vmatprep.subr.bf16.mxu0 0
        %343 = vmatpush1.bf16.xpose.msra.mxu0 0
        %344 = vmatprep.subr.bf16.mxu0 0
        %345 = vmatpush1.bf16.xpose.msra.mxu0 0
        %346 = vmatprep.mubr.bf16.mxu0 0
        %347 = vmatmul.mubr.bf16.gmra.mrb[0].mxu0 %v309
        %v348 = vpop.f32.mrb[0].mxu0
        %v349 = vadd.f32 0.0, %v348
        %v350 = vpop.f32.mrb[0].mxu0
        %v351 = vpop.f32.mrb[0].mxu0
        %v352 = vpop.f32.mrb[0].mxu0
        %353 = vdwg.mxu0
        %v354 = vld [vmem:[#allocation2] sm:$0xff]
        %vm355 = vcmask 64512
        %v356 = vsel %vm355, %v349, -inf
        %357 = vmax.xlane.f32.xlu0 %v356
        %v358 = vpop.xlane.xlu0 %357
        %v359 = vmax.f32 %v354, %v358
        %v360 = vsub.f32 %v354, %v359
        %v361 = vmul.f32 %v360, 1.442695
        %v362 = vpow.pop %v361
        %364 = vset.pattern.permute.xlu0 0
        %365 = vperm.xlu0 %364, %v359
        %v366 = vpop.permute.xlu0 %365
        %v368 = vsub.f32 %v349, %v366
        %v369 = vmul.f32 %v368, 1.442695
        %v370 = vpow.pop %v369
        %v371 = vld [vmem:[#allocation3] sm:$0xff]
        %v372 = vmul.f32 %v362, %v371
        %v373 = vsel %vm355, %v370, 0.0
        %374 = vadd.xlane.f32.xlu0 %v373
        %v375 = vpop.xlane.xlu0 %374
        %v376 = vadd.f32 %v372, %v375
        %vm377 = vcmask 7168
        %378 = vst.msk [vmem:[#allocation3] sm:$0xff] %vm377, %v376
        %v379 = vld [vmem:[#allocation4] sm:$0xff]
        %381 = vset.pattern.permute.xlu0 0
        %382 = vperm.xlu0 %381, %v362
        %v383 = vpop.permute.xlu0 %382
        %v385 = vmul.f32 %v383, %v379
        %v386 = vpack.c.bf16 %v370, %v370
        %v388 = vsel %vm355, %v386, 0
        %vm390 = vcmask 1043456
        %v392 = vsel %vm390, %v306, 0
        %394 = vmatprep.subr.bf16.mxu0 0
        %395 = vmatpush1.bf16.msra.mxu0 %v392
        %396 = vmatprep.subr.bf16.mxu0 0
        %397 = vmatpush1.bf16.msra.mxu0 0
        %398 = vmatprep.subr.bf16.mxu0 0
        %399 = vmatpush1.bf16.msra.mxu0 0
        %400 = vmatprep.subr.bf16.mxu0 0
        %401 = vmatpush1.bf16.msra.mxu0 0
        %402 = vmatprep.subr.bf16.mxu0 0
        %403 = vmatpush1.bf16.msra.mxu0 0
        %404 = vmatprep.subr.bf16.mxu0 0
        %405 = vmatpush1.bf16.msra.mxu0 0
        %406 = vmatprep.subr.bf16.mxu0 0
        %407 = vmatpush1.bf16.msra.mxu0 0
        %408 = vmatprep.subr.bf16.mxu0 0
        %409 = vmatpush1.bf16.msra.mxu0 0
        %410 = vmatprep.subr.bf16.mxu0 0
        %411 = vmatpush1.bf16.msra.mxu0 0
        %412 = vmatprep.subr.bf16.mxu0 0
        %413 = vmatpush1.bf16.msra.mxu0 0
        %414 = vmatprep.subr.bf16.mxu0 0
        %415 = vmatpush1.bf16.msra.mxu0 0
        %416 = vmatprep.subr.bf16.mxu0 0
        %417 = vmatpush1.bf16.msra.mxu0 0
        %418 = vmatprep.subr.bf16.mxu0 0
        %419 = vmatpush1.bf16.msra.mxu0 0
        %420 = vmatprep.subr.bf16.mxu0 0
        %421 = vmatpush1.bf16.msra.mxu0 0
        %422 = vmatprep.subr.bf16.mxu0 0
        %423 = vmatpush1.bf16.msra.mxu0 0
        %424 = vmatprep.subr.bf16.mxu0 0
        %425 = vmatpush1.bf16.msra.mxu0 0
        %426 = vmatprep.mubr.bf16.mxu0 0
        %427 = vmatmul.mubr.bf16.gmra.mrb[0].mxu0 %v388
        %v428 = vpop.f32.mrb[0].mxu0
        %v429 = vadd.f32 0.0, %v428
        %v430 = vpop.f32.mrb[0].mxu0
        %v431 = vpop.f32.mrb[0].mxu0
        %v432 = vpop.f32.mrb[0].mxu0
        %433 = vdwg.mxu0
        %v434 = vadd.f32 %v385, %v429
        %435 = vst.msk [vmem:[#allocation4] sm:$0xff] %vm307, %v434
        %436 = vst.msk [vmem:[#allocation2] sm:$0xff] %vm377, %v359
        // Predicated region
        $region49: #{tpu_custom_call.1} parent=31 // pred_check
          %p437 = pneg %p288
        $region50: #{tpu_custom_call.1} parent=31 // pred_check_branch
          %439 = sbr.rel (%p437) target = $region52
        $region51: #{tpu_custom_call.1} parent=31 // pred_region
          %v440 = vld [vmem:[#allocation3] sm:$0xff]
          %v441 = vrcp.pop %v440
          %v442 = vld [vmem:[#allocation4] sm:$0xff]
          %444 = vset.pattern.permute.xlu0 0
          %445 = vperm.xlu0 %444, %v441
          %v446 = vpop.permute.xlu0 %445
          %v448 = vmul.f32 %v442, %v446
          %449 = vst.msk [vmem:[%s286] sm:$0xff] %vm307, %v448
        $region52: #{tpu_custom_call.1} parent=31 // pred_fallthru
          _
        %s450 = sand.u32 %s136, 1
        %s451 = scalar_lea.sflag [#allocation8], %s450
        %s452 = sand.u32 %s136, 1
        %s453 = smul.addr %s452, 8
        %s454 = scalar_lea.vmem [#allocation12], %s453
        // Predicated region
        $region53: #{tpu_custom_call.1} parent=31 // pred_check
          %p455 = pneg %p146
        $region54: #{tpu_custom_call.1} parent=31 // pred_check_branch
          %457 = sbr.rel (%p455) target = $region56
        $region55: #{tpu_custom_call.1} parent=31 // pred_region
          %s459 = ssub.s32 128, 128
          %460 = vsyncadd %s451, %s459
          %s461 = sadd.s32 %s29, %s28
          %s462 = smul.addr %s461, 128
          %s463 = scalar_lea.hbm %s3, %s462
          %s465 = sshll.u32 %s454, 4
          %s466 = int_to_ptr.vmem [resolvable:$true] %s465
          %468 = dma.vmem_to_hbm [thread:$0]  %s466, 128, %s463, %s451
        $region56: #{tpu_custom_call.1} parent=31 // pred_fallthru
          _
      $region32: #{tpu_custom_call.1} parent=5 // pred_fallthru
        _
      %p469 = scmp.le.s32.totalorder 2, %s18
      // Predicated region
      $region57: #{tpu_custom_call.1} parent=5 // pred_check
        %p470 = pneg %p469
      $region58: #{tpu_custom_call.1} parent=5 // pred_check_branch
        %472 = sbr.rel (%p470) target = $region60
      $region59: #{tpu_custom_call.1} parent=5 // pred_region
        %s473 = ssub.s32 %s18, 2
        // Predicated region
        $region61: #{tpu_custom_call.1} parent=59 // pred_check
          %p474 = pneg %p152
        $region62: #{tpu_custom_call.1} parent=59 // pred_check_branch
          %476 = sbr.rel (%p474) target = $region64
        $region63: #{tpu_custom_call.1} parent=59 // pred_region
          %s477 = sand.u32 %s137, 1
          %s478 = scalar_lea.sflag [#allocation8], %s477
          %s479 = sand.u32 %s137, 1
          %s480 = smul.addr %s479, 8
          %s481 = scalar_lea.vmem [#allocation12], %s480
          %482 = dma.done %s478, 128
        $region64: #{tpu_custom_call.1} parent=59 // pred_fallthru
          _
      $region60: #{tpu_custom_call.1} parent=5 // pred_fallthru
        _
    $region6: #{tpu_custom_call.1} parent=1 // loop_footer
      %s22 = sadd.s32 1, %s18
    $region7: #{tpu_custom_call.1} parent=1 // loop_footer_branch
      %17 = sbr.rel target = $region3
    $region8: #{tpu_custom_call.1} parent=1 // loop_exit
      _
    %483 = vsyncpa [#allocation7], 1
    %s484 = scalar_lea.sflag [#allocation7], 1
    %485 = vsyncpa %s484, 1
    %486 = vsyncpa [#allocation10], 1
    %s487 = scalar_lea.sflag [#allocation10], 1
    %488 = vsyncpa %s487, 1
    %489 = vsyncpa [#allocation8], 1
    %s490 = scalar_lea.sflag [#allocation8], 1
    %491 = vsyncpa %s490, 1

</llo_original>
